<compile_context>
chip_gen: v7x
topology: tpu7x:2x2x1
jax: 0.10.0
libtpu: 0.0.40
codegen_flags: <defaults>
</compile_context>

<pallas_src>
import jax
import jax.numpy as jnp
from jax.experimental import pallas as pl
from jax.experimental.pallas import tpu as pltpu


def _round_up(x, m):
    return ((x + m - 1) // m) * m


def _cdiv(a, b):
    return -(-a // b)


def _sublane_multiple(dtype):
    itemsize = jnp.dtype(dtype).itemsize
    return {4: 8, 2: 16, 1: 32}.get(itemsize, 8)


def _make_kernel(n_inputs):
    """Kernel over one row tile: acc = sum_i x_i @ w_i  (w_i pre-scaled by 1/n), + bias."""

    def kernel(*refs):
        x_refs = refs[:n_inputs]                      # each (tm, K_i)
        w_refs = refs[n_inputs:2 * n_inputs]          # each (K_i, d_model), VMEM-resident
        b_ref = refs[2 * n_inputs]                    # (1, d_model), f32 (mean bias)
        o_ref = refs[2 * n_inputs + 1]                # (tm, d_model)

        acc = jnp.dot(x_refs[0][...], w_refs[0][...],
                      preferred_element_type=jnp.float32)
        for i in range(1, n_inputs):
            acc = acc + jnp.dot(x_refs[i][...], w_refs[i][...],
                                preferred_element_type=jnp.float32)
        o_ref[...] = (acc + b_ref[...]).astype(o_ref.dtype)

    return kernel


# Keep the total kernel VMEM footprint comfortably under v7x's 64 MiB physical VMEM.
_VMEM_BUDGET_BYTES = 44 * 1024 * 1024


def multi_linear_embedding(x_list, weights, biases, *, tm=512, out_dtype=None):
    """Pallas implementation of MultiLinearEmbedding.forward.

    Args:
      x_list:  list of arrays, x_list[i]: (N, S, in_features - i).  The kernel reads
               them in this dtype (pass bf16 arrays for the halved-HBM-read path;
               no wrapper-side cast is performed).
      weights: list of arrays, weights[i]: (d_model, in_features - i) (torch Linear layout)
      biases:  list of arrays, biases[i]:  (d_model,)
      tm:      requested row tile (rows of N*S per grid step); clamped by the VMEM
               budget, the input size, and sublane alignment.
      out_dtype: optional output dtype (e.g. jnp.bfloat16 for bf16 consumers);
                 defaults to the activation dtype.  Accumulation is always f32.

    Returns:
      (N, S, d_model) array = mean_i(x_list[i] @ weights[i].T + biases[i])
    """
    n = len(x_list)
    N, S = x_list[0].shape[:2]
    d_model = weights[0].shape[0]
    x_dtype = x_list[0].dtype
    if out_dtype is None:
        out_dtype = x_dtype

    M = N * S
    K_list = [w.shape[1] for w in weights]
    sum_k = sum(K_list)
    inv_n = 1.0 / n

    x_bytes = jnp.dtype(x_dtype).itemsize
    out_bytes = jnp.dtype(out_dtype).itemsize
    sublane = _sublane_multiple(x_dtype)

    # ---- tile-size / VMEM budgeting -------------------------------------------------
    # Double-buffered activation + output tiles per row, plus (conservatively 2x
    # buffered) resident weights and bias.
    per_row_bytes = 2 * (sum_k * x_bytes + d_model * out_bytes)
    fixed_bytes = 2 * (sum_k * d_model * x_bytes) + 2 * (d_model * 4)

    tm_cap = (_VMEM_BUDGET_BYTES - fixed_bytes) // max(per_row_bytes, 1)
    tm_cap = max(sublane, (tm_cap // sublane) * sublane)

    tm = max(sublane, min(tm, tm_cap, _round_up(M, sublane)))
    # Ensure the row axis splits into >= 2 tiles whenever possible so
    # dimension_semantics=("parallel",) can use both v7x TensorCores.
    tm = min(tm, max(sublane, _round_up(_cdiv(M, 2), sublane)))
    grid_m = _cdiv(M, tm)

    footprint = fixed_bytes + tm * per_row_bytes
    vmem_limit_bytes = int(min(max(footprint + (4 << 20), 16 << 20), 96 << 20))

    # ---- operand preparation (all tiny / reshape-only; no activation copies) --------
    xs, ws = [], []
    for x, w in zip(x_list, weights):
        k_i = w.shape[1]
        xs.append(x.reshape(M, k_i))                 # free reshape, no concat copy
        # Fold mean's 1/n into the (tiny) weights; match the activation dtype so the
        # MXU sees homogeneous inputs (bf16 weights when x is bf16, f32 otherwise).
        ws.append((w.T * inv_n).astype(x_dtype))

    b_mean = jnp.mean(jnp.stack(biases, axis=0), axis=0).astype(jnp.float32)
    b_mean = b_mean.reshape(1, d_model)

    in_specs = (
        # Activations: stream one row tile per grid step.
        [pl.BlockSpec((tm, k_i), lambda i: (i, 0)) for k_i in K_list]
        # Weights: full block, constant index -> fetched once, resident across the grid.
        + [pl.BlockSpec((k_i, d_model), lambda i: (0, 0)) for k_i in K_list]
        # Mean bias.
        + [pl.BlockSpec((1, d_model), lambda i: (0, 0))]
    )

    cost = pl.CostEstimate(
        flops=2 * M * sum_k * d_model,
        transcendentals=0,
        bytes_accessed=(M * sum_k * x_bytes            # activation reads
                        + sum_k * d_model * x_bytes    # weight reads
                        + d_model * 4                  # bias read
                        + M * d_model * out_bytes),    # output writes
    )

    out = pl.pallas_call(
        _make_kernel(n),
        out_shape=jax.ShapeDtypeStruct((M, d_model), out_dtype),
        grid_spec=pltpu.PrefetchScalarGridSpec(
            num_scalar_prefetch=0,
            grid=(grid_m,),
            in_specs=in_specs,
            # Unpadded (tm, d_model) block: legal since d_model equals the full last
            # dim; avoids 4x write amplification + a slice pass for small d_model.
            out_specs=pl.BlockSpec((tm, d_model), lambda i: (i, 0)),
        ),
        compiler_params=pltpu.CompilerParams(
            # Independent row tiles -> shardable across TensorCores (v7x megacore).
            dimension_semantics=("parallel",),
            vmem_limit_bytes=vmem_limit_bytes,
        ),
        cost_estimate=cost,
    )(*xs, *ws, b_mean)

    return out.reshape(N, S, d_model)


def _reference(x_list, weights, biases):
    ys = [x @ w.T + b for x, w, b in zip(x_list, weights, biases)]
    return jnp.mean(jnp.stack(ys, axis=1), axis=1)


if __name__ == "__main__":
    # Module hyperparameters (small demo shapes).
    in_features = 16
    n_sub_ts = 3
    d_model = 32
    N, S = 2, 8

    key = jax.random.PRNGKey(0)

    # Deterministic synthetic parameters (shapes match nn.Linear(in_features - i, d_model)).
    weights, biases, x_list = [], [], []
    for i in range(n_sub_ts):
        key, kw, kb, kx = jax.random.split(key, 4)
        f_i = in_features - i
        weights.append(jax.random.normal(kw, (d_model, f_i), dtype=jnp.float32) * 0.05)
        biases.append(jax.random.normal(kb, (d_model,), dtype=jnp.float32) * 0.05)
        x_list.append(jax.random.normal(kx, (N, S, f_i), dtype=jnp.float32))

    ref = _reference(x_list, weights, biases)

    # f32 path: exact check.
    out = jax.block_until_ready(multi_linear_embedding(x_list, weights, biases))
    assert out.shape == (N, S, d_model)
    assert jnp.allclose(out, ref, atol=1e-5, rtol=1e-5)

    # bf16-in-HBM path (all generations): activations arrive bf16 from the producer,
    # so the kernel's HBM reads halve; accumulation stays f32; output emitted in bf16
    # for a bf16 consumer. Relaxed tolerance vs the f32 reference.
    x_bf16 = [x.astype(jnp.bfloat16) for x in x_list]
    out_bf16 = jax.block_until_ready(
        multi_linear_embedding(x_bf16, weights, biases, out_dtype=jnp.bfloat16))
    assert out_bf16.shape == (N, S, d_model)
    assert jnp.allclose(out_bf16.astype(jnp.float32), ref, atol=5e-2, rtol=5e-2)

    print("KERNEL_OK")
</pallas_src>

<mosaic_0001>
module attributes {stable_mosaic.version = 11 : i64} {
  func.func @kernel(%arg0: i32, %arg1: memref<8x16xf32, #tpu.memory_space<vmem>>, %arg2: memref<8x15xf32, #tpu.memory_space<vmem>>, %arg3: memref<8x14xf32, #tpu.memory_space<vmem>>, %arg4: memref<16x32xf32, #tpu.memory_space<vmem>>, %arg5: memref<15x32xf32, #tpu.memory_space<vmem>>, %arg6: memref<14x32xf32, #tpu.memory_space<vmem>>, %arg7: memref<1x32xf32, #tpu.memory_space<vmem>>, %arg8: memref<8x32xf32, #tpu.memory_space<vmem>>) attributes {dimension_semantics = [#tpu.dimension_semantics<parallel>], iteration_bounds = array<i64: 2>, scalar_prefetch = 0 : i64, scratch_operands = 0 : i64, tpu.core_type = #tpu.core_type<tc>, window_params = [{transform_indices = @transform_0, window_bounds = array<i64: 8, 16>}, {transform_indices = @transform_1, window_bounds = array<i64: 8, 15>}, {transform_indices = @transform_2, window_bounds = array<i64: 8, 14>}, {pipeline_mode = #tpu.pipeline_mode<synchronous>, transform_indices = @transform_3, window_bounds = array<i64: 16, 32>}, {pipeline_mode = #tpu.pipeline_mode<synchronous>, transform_indices = @transform_4, window_bounds = array<i64: 15, 32>}, {pipeline_mode = #tpu.pipeline_mode<synchronous>, transform_indices = @transform_5, window_bounds = array<i64: 14, 32>}, {pipeline_mode = #tpu.pipeline_mode<synchronous>, transform_indices = @transform_6, window_bounds = array<i64: 1, 32>}, {transform_indices = @transform_7, window_bounds = array<i64: 8, 32>}]} {
    %c0 = arith.constant 0 : index
    %c0_0 = arith.constant 0 : index
    %0 = vector.load %arg1[%c0, %c0_0] : memref<8x16xf32, #tpu.memory_space<vmem>>, vector<8x16xf32>
    %c0_1 = arith.constant 0 : index
    %c0_2 = arith.constant 0 : index
    %1 = vector.load %arg4[%c0_1, %c0_2] : memref<16x32xf32, #tpu.memory_space<vmem>>, vector<16x32xf32>
    %cst = arith.constant dense<0.000000e+00> : vector<8x32xf32>
    %2 = tpu.matmul %0, %1, %cst {dimension_numbers = #tpu.dot_dimension_numbers<[1], [0], [0], [1], [0, 0, 1, 1], [], []>} : vector<8x16xf32>, vector<16x32xf32>, vector<8x32xf32> -> vector<8x32xf32>
    %c0_3 = arith.constant 0 : index
    %c0_4 = arith.constant 0 : index
    %3 = vector.load %arg2[%c0_3, %c0_4] : memref<8x15xf32, #tpu.memory_space<vmem>>, vector<8x15xf32>
    %c0_5 = arith.constant 0 : index
    %c0_6 = arith.constant 0 : index
    %4 = vector.load %arg5[%c0_5, %c0_6] : memref<15x32xf32, #tpu.memory_space<vmem>>, vector<15x32xf32>
    %cst_7 = arith.constant dense<0.000000e+00> : vector<8x32xf32>
    %5 = tpu.matmul %3, %4, %cst_7 {dimension_numbers = #tpu.dot_dimension_numbers<[1], [0], [0], [1], [0, 0, 1, 1], [], []>} : vector<8x15xf32>, vector<15x32xf32>, vector<8x32xf32> -> vector<8x32xf32>
    %6 = arith.addf %2, %5 : vector<8x32xf32>
    %c0_8 = arith.constant 0 : index
    %c0_9 = arith.constant 0 : index
    %7 = vector.load %arg3[%c0_8, %c0_9] : memref<8x14xf32, #tpu.memory_space<vmem>>, vector<8x14xf32>
    %c0_10 = arith.constant 0 : index
    %c0_11 = arith.constant 0 : index
    %8 = vector.load %arg6[%c0_10, %c0_11] : memref<14x32xf32, #tpu.memory_space<vmem>>, vector<14x32xf32>
    %cst_12 = arith.constant dense<0.000000e+00> : vector<8x32xf32>
    %9 = tpu.matmul %7, %8, %cst_12 {dimension_numbers = #tpu.dot_dimension_numbers<[1], [0], [0], [1], [0, 0, 1, 1], [], []>} : vector<8x14xf32>, vector<14x32xf32>, vector<8x32xf32> -> vector<8x32xf32>
    %10 = arith.addf %6, %9 : vector<8x32xf32>
    %c0_13 = arith.constant 0 : index
    %c0_14 = arith.constant 0 : index
    %11 = vector.load %arg7[%c0_13, %c0_14] : memref<1x32xf32, #tpu.memory_space<vmem>>, vector<1x32xf32>
    %12 = vector.broadcast %11 : vector<1x32xf32> to vector<8x32xf32>
    %13 = arith.addf %10, %12 : vector<8x32xf32>
    %c0_15 = arith.constant 0 : index
    %c0_16 = arith.constant 0 : index
    %14 = vector.load %arg8[%c0_15, %c0_16] : memref<8x32xf32, #tpu.memory_space<vmem>>, vector<8x32xf32>
    tpu.vector_store %arg8[%c0_15, %c0_16], %13 {strides = array<i32>} : memref<8x32xf32, #tpu.memory_space<vmem>>, vector<8x32xf32>,
    return
  }
  func.func @transform_0(%arg0: i32) -> (i32, i32) {
    %c0_i32 = arith.constant 0 : i32
    %c0_i32_0 = arith.constant 0 : i32
    return %arg0, %c0_i32 : i32, i32
  }
  func.func @transform_1(%arg0: i32) -> (i32, i32) {
    %c0_i32 = arith.constant 0 : i32
    %c0_i32_0 = arith.constant 0 : i32
    return %arg0, %c0_i32 : i32, i32
  }
  func.func @transform_2(%arg0: i32) -> (i32, i32) {
    %c0_i32 = arith.constant 0 : i32
    %c0_i32_0 = arith.constant 0 : i32
    return %arg0, %c0_i32 : i32, i32
  }
  func.func @transform_3(%arg0: i32) -> (i32, i32) {
    %c0_i32 = arith.constant 0 : i32
    %c0_i32_0 = arith.constant 0 : i32
    %c0_i32_1 = arith.constant 0 : i32
    return %c0_i32, %c0_i32_0 : i32, i32
  }
  func.func @transform_4(%arg0: i32) -> (i32, i32) {
    %c0_i32 = arith.constant 0 : i32
    %c0_i32_0 = arith.constant 0 : i32
    %c0_i32_1 = arith.constant 0 : i32
    return %c0_i32, %c0_i32_0 : i32, i32
  }
  func.func @transform_5(%arg0: i32) -> (i32, i32) {
    %c0_i32 = arith.constant 0 : i32
    %c0_i32_0 = arith.constant 0 : i32
    %c0_i32_1 = arith.constant 0 : i32
    return %c0_i32, %c0_i32_0 : i32, i32
  }
  func.func @transform_6(%arg0: i32) -> (i32, i32) {
    %c0_i32 = arith.constant 0 : i32
    %c0_i32_0 = arith.constant 0 : i32
    %c0_i32_1 = arith.constant 0 : i32
    return %c0_i32, %c0_i32_0 : i32, i32
  }
  func.func @transform_7(%arg0: i32) -> (i32, i32) {
    %c0_i32 = arith.constant 0 : i32
    %c0_i32_0 = arith.constant 0 : i32
    return %arg0, %c0_i32 : i32, i32
  }
}

</mosaic_0001>

<llo_original>
// kernel: tpu_custom_call.1
$region0: #{tpu_custom_call.1}
  #allocation0 [shape = 'u32[]', space=smem, size = 0x4, offset = 0x4, fixed_abs, tag = 'smem constant byte address 0x4 - core index']
  #allocation1 [shape = 'u32[144,128]{1,0:T(1,128)}', space=vmem, size = 0x12000, scoped, tag = 'internal scratch']
  %s0 = inlined_call_operand.hbm [shape: f32[16,16], index: 0, kind: input, shape index: {}]
  %s1 = inlined_call_operand.hbm [shape: f32[16,15], index: 1, kind: input, shape index: {}]
  %s2 = inlined_call_operand.hbm [shape: f32[16,14], index: 2, kind: input, shape index: {}]
  %s3 = inlined_call_operand.hbm [shape: f32[16,32], index: 3, kind: input, shape index: {}]
  %s4 = inlined_call_operand.hbm [shape: f32[15,32], index: 4, kind: input, shape index: {}]
  %s5 = inlined_call_operand.vmem [shape: f32[14,32], index: 5, kind: input, shape index: {}]
  %s6 = inlined_call_operand.vmem [shape: f32[1,32], index: 6, kind: input, shape index: {}]
  %s7 = inlined_call_operand.hbm [shape: f32[16,32], index: 7, kind: output, shape index: {}]
  %s8 = sld [smem:[#allocation0]]
  $region81: #{tpu_custom_call.1} parent=0
    _
  %s10 = ssub.s32 1, %s8
  %s11 = scalar_select 0, %s10, %s8
  $region1: #{tpu_custom_call.1} parent=0
    #allocation2 [shape = 'u8[8192]{0}', space=vmem, size = 0x2000, scoped, tag = 'input window, operand 0']
    #allocation3 [shape = 's32[2]{0}', space=sflag, size = 0x8, scoped, tag = 'scoped memory for tpu_custom_call.1']
    #allocation4 [shape = 's32[2]{0}', space=sflag, size = 0x8, scoped, tag = 'scoped memory for tpu_custom_call.1']
    #allocation5 [shape = 'u8[8192]{0}', space=vmem, size = 0x2000, scoped, tag = 'input window, operand 1']
    #allocation6 [shape = 's32[2]{0}', space=sflag, size = 0x8, scoped, tag = 'scoped memory for tpu_custom_call.1']
    #allocation7 [shape = 'u8[8192]{0}', space=vmem, size = 0x2000, scoped, tag = 'input window, operand 2']
    #allocation8 [shape = 'u8[8192]{0}', space=vmem, size = 0x2000, scoped, tag = 'input window, operand 3, single buffered']
    #allocation9 [shape = 's32[1]{0}', space=sflag, size = 0x4, scoped, tag = 'scoped memory for tpu_custom_call.1']
    #allocation10 [shape = 'u8[8192]{0}', space=vmem, size = 0x2000, scoped, tag = 'input window, operand 4, single buffered']
    #allocation11 [shape = 'u8[8192]{0}', space=vmem, size = 0x2000, scoped, tag = 'output window, operand 0']
    %12 = vsyncpa [#allocation3], 0
    %s13 = scalar_lea.sflag [#allocation3], 1
    %14 = vsyncpa %s13, 0
    %15 = vsyncpa [#allocation6], 0
    %s16 = scalar_lea.sflag [#allocation6], 1
    %17 = vsyncpa %s16, 0
    %18 = vsyncpa [#allocation9], 0
    %19 = vsyncpa [#allocation4], 0
    %s20 = scalar_lea.sflag [#allocation4], 1
    %21 = vsyncpa %s20, 0
    loop: start=0, step=1, limit=4
    $region2: #{tpu_custom_call.1} parent=1 // loop_pre_header
      _
    $region3: #{tpu_custom_call.1} parent=1 // loop_header
      %s23 = sphi 0, %s27
      %p24 = scmp.ge.s32.totalorder %s23, 4
      %s33 = sphi 0, %s35
      %s36 = sphi 0, %s33
      %s37 = sphi 0, %s36
      %s53 = sphi 0, %s37
      %s59 = sphi 0, %s61
      %s62 = sphi 0, %s59
      %s63 = sphi 0, %s62
      %s79 = sphi 0, %s63
      %s85 = sphi 0, %s87
      %s88 = sphi 0, %s85
      %s89 = sphi 0, %s88
      %s105 = sphi 0, %s89
      %s109 = sphi 0, %s109
      %s111 = sphi 0, %s109
      %s112 = sphi 0, %s111
      %s126 = sphi 0, %s112
      %s130 = sphi 0, %s130
      %s132 = sphi 0, %s130
      %s133 = sphi 0, %s132
      %s147 = sphi 0, %s133
      %s151 = sphi 0, %s151
      %s153 = sphi 0, %s151
      %s154 = sphi 0, %s153
      %s168 = sphi 0, %s154
      %s172 = sphi 0, %s172
      %s174 = sphi 0, %s172
      %s175 = sphi 0, %s174
      %s189 = sphi 0, %s175
      %s195 = sphi 0, %s197
      %s198 = sphi 0, %s195
      %s199 = sphi 0, %s198
      %s215 = sphi 0, %s199
    $region4: #{tpu_custom_call.1} parent=1 // loop_header_branch
      %26 = sbr.rel (%p24) target = $region8
    $region5: #{tpu_custom_call.1} parent=1 // loop_body
      %s28 = ssub.s32 %s23, 1
      %s29 = ssub.s32 %s23, 2
      %s30 = sadd.s32 %s23, 1
      %s31 = ssub.s32 %s23, %s30
      %p32 = scmp.eq.s32.totalorder %s31, 0
      %s34 = sadd.s32 %s33, 1
      %s35 = scalar_select %p32, %s33, %s34
      %p38 = pneg %p32
      %p39 = scmp.eq.s32.totalorder %s23, 1
      %p40 = por %p38, %p39
      %p41 = scmp.ne.s32.totalorder %s33, %s36
      %p42 = scmp.eq.s32.totalorder %s23, 0
      %p43 = por %p41, %p42
      %p44 = scmp.ne.s32.totalorder %s33, %s36
      %p45 = scmp.eq.s32.totalorder %s28, 1
      %p46 = por %p44, %p45
      %p47 = scmp.ne.s32.totalorder %s36, %s37
      %p48 = scmp.eq.s32.totalorder %s28, 0
      %p49 = por %p47, %p48
      %p50 = scmp.ne.s32.totalorder %s36, %s37
      %p51 = scmp.eq.s32.totalorder %s29, 1
      %p52 = por %p50, %p51
      %p54 = scmp.ne.s32.totalorder %s37, %s53
      %p55 = scmp.eq.s32.totalorder %s29, 0
      %p56 = por %p54, %p55
      %s57 = ssub.s32 %s23, %s30
      %p58 = scmp.eq.s32.totalorder %s57, 0
      %s60 = sadd.s32 %s59, 1
      %s61 = scalar_select %p58, %s59, %s60
      %p64 = pneg %p58
      %p65 = scmp.eq.s32.totalorder %s23, 1
      %p66 = por %p64, %p65
      %p67 = scmp.ne.s32.totalorder %s59, %s62
      %p68 = scmp.eq.s32.totalorder %s23, 0
      %p69 = por %p67, %p68
      %p70 = scmp.ne.s32.totalorder %s59, %s62
      %p71 = scmp.eq.s32.totalorder %s28, 1
      %p72 = por %p70, %p71
      %p73 = scmp.ne.s32.totalorder %s62, %s63
      %p74 = scmp.eq.s32.totalorder %s28, 0
      %p75 = por %p73, %p74
      %p76 = scmp.ne.s32.totalorder %s62, %s63
      %p77 = scmp.eq.s32.totalorder %s29, 1
      %p78 = por %p76, %p77
      %p80 = scmp.ne.s32.totalorder %s63, %s79
      %p81 = scmp.eq.s32.totalorder %s29, 0
      %p82 = por %p80, %p81
      %s83 = ssub.s32 %s23, %s30
      %p84 = scmp.eq.s32.totalorder %s83, 0
      %s86 = sadd.s32 %s85, 1
      %s87 = scalar_select %p84, %s85, %s86
      %p90 = pneg %p84
      %p91 = scmp.eq.s32.totalorder %s23, 1
      %p92 = por %p90, %p91
      %p93 = scmp.ne.s32.totalorder %s85, %s88
      %p94 = scmp.eq.s32.totalorder %s23, 0
      %p95 = por %p93, %p94
      %p96 = scmp.ne.s32.totalorder %s85, %s88
      %p97 = scmp.eq.s32.totalorder %s28, 1
      %p98 = por %p96, %p97
      %p99 = scmp.ne.s32.totalorder %s88, %s89
      %p100 = scmp.eq.s32.totalorder %s28, 0
      %p101 = por %p99, %p100
      %p102 = scmp.ne.s32.totalorder %s88, %s89
      %p103 = scmp.eq.s32.totalorder %s29, 1
      %p104 = por %p102, %p103
      %p106 = scmp.ne.s32.totalorder %s89, %s105
      %p107 = scmp.eq.s32.totalorder %s29, 0
      %p108 = por %p106, %p107
      %s110 = sadd.s32 %s109, 1
      %p113 = scmp.eq.s32.totalorder %s23, 1
      %p114 = scmp.ne.s32.totalorder %s109, %s111
      %p115 = scmp.eq.s32.totalorder %s23, 0
      %p116 = por %p114, %p115
      %p117 = scmp.ne.s32.totalorder %s109, %s111
      %p118 = scmp.eq.s32.totalorder %s28, 1
      %p119 = por %p117, %p118
      %p120 = scmp.ne.s32.totalorder %s111, %s112
      %p121 = scmp.eq.s32.totalorder %s28, 0
      %p122 = por %p120, %p121
      %p123 = scmp.ne.s32.totalorder %s111, %s112
      %p124 = scmp.eq.s32.totalorder %s29, 1
      %p125 = por %p123, %p124
      %p127 = scmp.ne.s32.totalorder %s112, %s126
      %p128 = scmp.eq.s32.totalorder %s29, 0
      %p129 = por %p127, %p128
      %s131 = sadd.s32 %s130, 1
      %p134 = scmp.eq.s32.totalorder %s23, 1
      %p135 = scmp.ne.s32.totalorder %s130, %s132
      %p136 = scmp.eq.s32.totalorder %s23, 0
      %p137 = por %p135, %p136
      %p138 = scmp.ne.s32.totalorder %s130, %s132
      %p139 = scmp.eq.s32.totalorder %s28, 1
      %p140 = por %p138, %p139
      %p141 = scmp.ne.s32.totalorder %s132, %s133
      %p142 = scmp.eq.s32.totalorder %s28, 0
      %p143 = por %p141, %p142
      %p144 = scmp.ne.s32.totalorder %s132, %s133
      %p145 = scmp.eq.s32.totalorder %s29, 1
      %p146 = por %p144, %p145
      %p148 = scmp.ne.s32.totalorder %s133, %s147
      %p149 = scmp.eq.s32.totalorder %s29, 0
      %p150 = por %p148, %p149
      %s152 = sadd.s32 %s151, 1
      %p155 = scmp.eq.s32.totalorder %s23, 1
      %p156 = scmp.ne.s32.totalorder %s151, %s153
      %p157 = scmp.eq.s32.totalorder %s23, 0
      %p158 = por %p156, %p157
      %p159 = scmp.ne.s32.totalorder %s151, %s153
      %p160 = scmp.eq.s32.totalorder %s28, 1
      %p161 = por %p159, %p160
      %p162 = scmp.ne.s32.totalorder %s153, %s154
      %p163 = scmp.eq.s32.totalorder %s28, 0
      %p164 = por %p162, %p163
      %p165 = scmp.ne.s32.totalorder %s153, %s154
      %p166 = scmp.eq.s32.totalorder %s29, 1
      %p167 = por %p165, %p166
      %p169 = scmp.ne.s32.totalorder %s154, %s168
      %p170 = scmp.eq.s32.totalorder %s29, 0
      %p171 = por %p169, %p170
      %s173 = sadd.s32 %s172, 1
      %p176 = scmp.eq.s32.totalorder %s23, 1
      %p177 = scmp.ne.s32.totalorder %s172, %s174
      %p178 = scmp.eq.s32.totalorder %s23, 0
      %p179 = por %p177, %p178
      %p180 = scmp.ne.s32.totalorder %s172, %s174
      %p181 = scmp.eq.s32.totalorder %s28, 1
      %p182 = por %p180, %p181
      %p183 = scmp.ne.s32.totalorder %s174, %s175
      %p184 = scmp.eq.s32.totalorder %s28, 0
      %p185 = por %p183, %p184
      %p186 = scmp.ne.s32.totalorder %s174, %s175
      %p187 = scmp.eq.s32.totalorder %s29, 1
      %p188 = por %p186, %p187
      %p190 = scmp.ne.s32.totalorder %s175, %s189
      %p191 = scmp.eq.s32.totalorder %s29, 0
      %p192 = por %p190, %p191
      %s193 = ssub.s32 %s23, %s30
      %p194 = scmp.eq.s32.totalorder %s193, 0
      %s196 = sadd.s32 %s195, 1
      %s197 = scalar_select %p194, %s195, %s196
      %p200 = pneg %p194
      %p201 = scmp.eq.s32.totalorder %s23, 1
      %p202 = por %p200, %p201
      %p203 = scmp.ne.s32.totalorder %s195, %s198
      %p204 = scmp.eq.s32.totalorder %s23, 0
      %p205 = por %p203, %p204
      %p206 = scmp.ne.s32.totalorder %s195, %s198
      %p207 = scmp.eq.s32.totalorder %s28, 1
      %p208 = por %p206, %p207
      %p209 = scmp.ne.s32.totalorder %s198, %s199
      %p210 = scmp.eq.s32.totalorder %s28, 0
      %p211 = por %p209, %p210
      %p212 = scmp.ne.s32.totalorder %s198, %s199
      %p213 = scmp.eq.s32.totalorder %s29, 1
      %p214 = por %p212, %p213
      %p216 = scmp.ne.s32.totalorder %s199, %s215
      %p217 = scmp.eq.s32.totalorder %s29, 0
      %p218 = por %p216, %p217
      %p219 = scmp.le.s32.totalorder 1, %s23
      %p220 = scmp.lt.s32.totalorder %s23, 3
      %p221 = pnand %p219, %p220
      %p222 = pneg %p221
      // Predicated region
      $region9: #{tpu_custom_call.1} parent=5 // pred_check
        _
      $region10: #{tpu_custom_call.1} parent=5 // pred_check_branch
        %224 = sbr.rel (%p221) target = $region12
      $region11: #{tpu_custom_call.1} parent=5 // pred_region
        %s225 = ssub.s32 %s23, 1
        // Predicated region
        $region13: #{tpu_custom_call.1} parent=11 // pred_check
          %p226 = pneg %p122
        $region14: #{tpu_custom_call.1} parent=11 // pred_check_branch
          %228 = sbr.rel (%p226) target = $region16
        $region15: #{tpu_custom_call.1} parent=11 // pred_region
          %s230 = ssub.s32 256, 256
          %231 = vsyncadd [#allocation9], %s230
          %s232 = sshll.u32 [#allocation8], 4
          %s233 = int_to_ptr.vmem [resolvable:$true] %s232
          %238 = dma.hbm_to_vmem [thread:$0]  %s3, 256, %s233, [#allocation9], 128, 128, 8
        $region16: #{tpu_custom_call.1} parent=11 // pred_fallthru
          _
        // Predicated region
        $region17: #{tpu_custom_call.1} parent=11 // pred_check
          %p239 = pneg %p143
        $region18: #{tpu_custom_call.1} parent=11 // pred_check_branch
          %241 = sbr.rel (%p239) target = $region20
        $region19: #{tpu_custom_call.1} parent=11 // pred_region
          %s243 = ssub.s32 256, 256
          %244 = vsyncadd [#allocation9], %s243
          %s245 = sshll.u32 [#allocation10], 4
          %s246 = int_to_ptr.vmem [resolvable:$true] %s245
          %251 = dma.hbm_to_vmem [thread:$0]  %s4, 256, %s246, [#allocation9], 128, 128, 8
        $region20: #{tpu_custom_call.1} parent=11 // pred_fallthru
          _
        // Predicated region
        $region21: #{tpu_custom_call.1} parent=11 // pred_check
          %p252 = pneg %p164
        $region22: #{tpu_custom_call.1} parent=11 // pred_check_branch
          %254 = sbr.rel (%p252) target = $region24
        $region23: #{tpu_custom_call.1} parent=11 // pred_region
          _
        $region24: #{tpu_custom_call.1} parent=11 // pred_fallthru
          _
        // Predicated region
        $region25: #{tpu_custom_call.1} parent=11 // pred_check
          %p255 = pneg %p185
        $region26: #{tpu_custom_call.1} parent=11 // pred_check_branch
          %257 = sbr.rel (%p255) target = $region28
        $region27: #{tpu_custom_call.1} parent=11 // pred_region
          _
        $region28: #{tpu_custom_call.1} parent=11 // pred_fallthru
          _
      $region12: #{tpu_custom_call.1} parent=5 // pred_fallthru
        _
      %p258 = scmp.lt.s32.totalorder %s23, 2
      // Predicated region
      $region29: #{tpu_custom_call.1} parent=5 // pred_check
        %p259 = pneg %p258
      $region30: #{tpu_custom_call.1} parent=5 // pred_check_branch
        %261 = sbr.rel (%p259) target = $region32
      $region31: #{tpu_custom_call.1} parent=5 // pred_region
        // Predicated region
        $region33: #{tpu_custom_call.1} parent=31 // pred_check
          %p262 = pneg %p43
        $region34: #{tpu_custom_call.1} parent=31 // pred_check_branch
          %264 = sbr.rel (%p262) target = $region36
        $region35: #{tpu_custom_call.1} parent=31 // pred_region
          %s265 = sand.u32 %s33, 1
          %s266 = scalar_lea.sflag [#allocation3], %s265
          %s267 = sand.u32 %s33, 1
          %s268 = smul.addr %s267, 8
          %s269 = scalar_lea.vmem [#allocation2], %s268
          %s271 = ssub.s32 128, 128
          %272 = vsyncadd %s266, %s271
          %s273 = smul.addr %s23, 128
          %s274 = scalar_lea.hbm %s0, %s273
          %s276 = sshll.u32 %s269, 4
          %s277 = int_to_ptr.vmem [resolvable:$true] %s276
          %279 = dma.hbm_to_vmem [thread:$0]  %s274, 128, %s277, %s266
        $region36: #{tpu_custom_call.1} parent=31 // pred_fallthru
          _
        // Predicated region
        $region37: #{tpu_custom_call.1} parent=31 // pred_check
          %p280 = pneg %p69
        $region38: #{tpu_custom_call.1} parent=31 // pred_check_branch
          %282 = sbr.rel (%p280) target = $region40
        $region39: #{tpu_custom_call.1} parent=31 // pred_region
          %s283 = sand.u32 %s23, 1
          %s284 = scalar_lea.sflag [#allocation6], %s283
          %s285 = sand.u32 %s59, 1
          %s286 = smul.addr %s285, 8
          %s287 = scalar_lea.vmem [#allocation5], %s286
          %s289 = ssub.s32 128, 128
          %290 = vsyncadd %s284, %s289
          %s291 = smul.addr %s23, 128
          %s292 = scalar_lea.hbm %s1, %s291
          %s294 = sshll.u32 %s287, 4
          %s295 = int_to_ptr.vmem [resolvable:$true] %s294
          %297 = dma.hbm_to_vmem [thread:$0]  %s292, 128, %s295, %s284
        $region40: #{tpu_custom_call.1} parent=31 // pred_fallthru
          _
        // Predicated region
        $region41: #{tpu_custom_call.1} parent=31 // pred_check
          %p298 = pneg %p95
        $region42: #{tpu_custom_call.1} parent=31 // pred_check_branch
          %300 = sbr.rel (%p298) target = $region44
        $region43: #{tpu_custom_call.1} parent=31 // pred_region
          %s301 = sand.u32 %s23, 1
          %s302 = scalar_lea.sflag [#allocation6], %s301
          %s303 = sand.u32 %s85, 1
          %s304 = smul.addr %s303, 8
          %s305 = scalar_lea.vmem [#allocation7], %s304
          %s307 = ssub.s32 128, 128
          %308 = vsyncadd %s302, %s307
          %s309 = smul.addr %s23, 128
          %s310 = scalar_lea.hbm %s2, %s309
          %s312 = sshll.u32 %s305, 4
          %s313 = int_to_ptr.vmem [resolvable:$true] %s312
          %315 = dma.hbm_to_vmem [thread:$0]  %s310, 128, %s313, %s302
        $region44: #{tpu_custom_call.1} parent=31 // pred_fallthru
          _
      $region32: #{tpu_custom_call.1} parent=5 // pred_fallthru
        _
      %p316 = scmp.le.s32.totalorder 1, %s23
      %p317 = scmp.lt.s32.totalorder %s23, 3
      %p318 = pnand %p316, %p317
      %p319 = pneg %p318
      // Predicated region
      $region45: #{tpu_custom_call.1} parent=5 // pred_check
        _
      $region46: #{tpu_custom_call.1} parent=5 // pred_check_branch
        %321 = sbr.rel (%p318) target = $region48
      $region47: #{tpu_custom_call.1} parent=5 // pred_region
        %s322 = ssub.s32 %s23, 1
        %s323 = sand.u32 %s36, 1
        %s324 = scalar_lea.sflag [#allocation3], %s323
        %s325 = sand.u32 %s36, 1
        %s326 = smul.addr %s325, 8
        %s327 = scalar_lea.vmem [#allocation2], %s326
        // Predicated region
        $region49: #{tpu_custom_call.1} parent=47 // pred_check
          %p328 = pneg %p49
        $region50: #{tpu_custom_call.1} parent=47 // pred_check_branch
          %330 = sbr.rel (%p328) target = $region52
        $region51: #{tpu_custom_call.1} parent=47 // pred_region
          %331 = dma.done %s324, 128
        $region52: #{tpu_custom_call.1} parent=47 // pred_fallthru
          _
        %s332 = sand.u32 %s28, 1
        %s333 = scalar_lea.sflag [#allocation6], %s332
        %s334 = sand.u32 %s62, 1
        %s335 = smul.addr %s334, 8
        %s336 = scalar_lea.vmem [#allocation5], %s335
        // Predicated region
        $region53: #{tpu_custom_call.1} parent=47 // pred_check
          %p337 = pneg %p75
        $region54: #{tpu_custom_call.1} parent=47 // pred_check_branch
          %339 = sbr.rel (%p337) target = $region56
        $region55: #{tpu_custom_call.1} parent=47 // pred_region
          %340 = dma.done %s333, 128
        $region56: #{tpu_custom_call.1} parent=47 // pred_fallthru
          _
        %s341 = sand.u32 %s28, 1
        %s342 = scalar_lea.sflag [#allocation6], %s341
        %s343 = sand.u32 %s88, 1
        %s344 = smul.addr %s343, 8
        %s345 = scalar_lea.vmem [#allocation7], %s344
        // Predicated region
        $region57: #{tpu_custom_call.1} parent=47 // pred_check
          %p346 = pneg %p101
        $region58: #{tpu_custom_call.1} parent=47 // pred_check_branch
          %348 = sbr.rel (%p346) target = $region60
        $region59: #{tpu_custom_call.1} parent=47 // pred_region
          %349 = dma.done %s342, 128
        $region60: #{tpu_custom_call.1} parent=47 // pred_fallthru
          _
        // Predicated region
        $region61: #{tpu_custom_call.1} parent=47 // pred_check
          %p350 = pneg %p122
        $region62: #{tpu_custom_call.1} parent=47 // pred_check_branch
          %352 = sbr.rel (%p350) target = $region64
        $region63: #{tpu_custom_call.1} parent=47 // pred_region
          %353 = dma.done [#allocation9], 256
        $region64: #{tpu_custom_call.1} parent=47 // pred_fallthru
          _
        // Predicated region
        $region65: #{tpu_custom_call.1} parent=47 // pred_check
          %p354 = pneg %p143
        $region66: #{tpu_custom_call.1} parent=47 // pred_check_branch
          %356 = sbr.rel (%p354) target = $region68
        $region67: #{tpu_custom_call.1} parent=47 // pred_region
          %357 = dma.done [#allocation9], 256
        $region68: #{tpu_custom_call.1} parent=47 // pred_fallthru
          _
        %s358 = sand.u32 %s36, 1
        %s359 = scalar_lea.sflag [#allocation3], %s358
        %s360 = sand.u32 %s36, 1
        %s361 = smul.addr %s360, 8
        %s362 = scalar_lea.vmem [#allocation2], %s361
        %p363 = pneg %p49
        %p364 = pneg %p46
        %s365 = sand.u32 %s28, 1
        %s366 = scalar_lea.sflag [#allocation6], %s365
        %s367 = sand.u32 %s62, 1
        %s368 = smul.addr %s367, 8
        %s369 = scalar_lea.vmem [#allocation5], %s368
        %p370 = pneg %p75
        %p371 = pneg %p72
        %s372 = sand.u32 %s28, 1
        %s373 = scalar_lea.sflag [#allocation6], %s372
        %s374 = sand.u32 %s88, 1
        %s375 = smul.addr %s374, 8
        %s376 = scalar_lea.vmem [#allocation7], %s375
        %p377 = pneg %p101
        %p378 = pneg %p98
        %p379 = pneg %p122
        %p380 = pneg %p119
        %p381 = pneg %p143
        %p382 = pneg %p140
        %p383 = pneg %p164
        %p384 = pneg %p161
        %p385 = pneg %p185
        %p386 = pneg %p182
        %p387 = pneg %p211
        %p388 = pneg %p208
        %s389 = sand.u32 %s198, 1
        %s390 = scalar_lea.sflag [#allocation4], %s389
        %s391 = sand.u32 %s198, 1
        %s392 = smul.addr %s391, 8
        %s393 = scalar_lea.vmem [#allocation11], %s392
        %v394 = vld [vmem:[%s327] sm:$0xff]
        %v395 = vld [vmem:[#allocation8] sm:$0xff]
        %v396 = vld [vmem:[#allocation8 + $0x8] sm:$0xff]
        %v397 = vld [vmem:[%s336] sm:$0xff]
        %v398 = vld [vmem:[#allocation10] sm:$0xff]
        %v399 = vld [vmem:[#allocation10 + $0x8] sm:$0x7f]
        %vm400 = vcmask 121856
        %v402 = vsel %vm400, %v397, 0
        %vm404 = vcmask 1046528
        %v406 = vsel %vm404, %v399, 0
        %408 = vmatprep.subr.mxu0 0.0
        %409 = vmatpush1.msra.mxu0 %v398
        %410 = vmatprep.subr.mxu0 0.0
        %411 = vmatpush1.msra.mxu0 %v406
        %412 = vmatprep.subr.mxu0 0.0
        %413 = vmatpush1.msra.mxu0 0.0
        %414 = vmatprep.subr.mxu0 0.0
        %415 = vmatpush1.msra.mxu0 0.0
        %416 = vmatprep.subr.mxu0 0.0
        %417 = vmatpush1.msra.mxu0 0.0
        %418 = vmatprep.subr.mxu0 0.0
        %419 = vmatpush1.msra.mxu0 0.0
        %420 = vmatprep.subr.mxu0 0.0
        %421 = vmatpush1.msra.mxu0 0.0
        %422 = vmatprep.subr.mxu0 0.0
        %423 = vmatpush1.msra.mxu0 0.0
        %424 = vmatprep.subr.mxu0 0.0
        %425 = vmatpush1.msra.mxu0 0.0
        %426 = vmatprep.subr.mxu0 0.0
        %427 = vmatpush1.msra.mxu0 0.0
        %428 = vmatprep.subr.mxu0 0.0
        %429 = vmatpush1.msra.mxu0 0.0
        %430 = vmatprep.subr.mxu0 0.0
        %431 = vmatpush1.msra.mxu0 0.0
        %432 = vmatprep.subr.mxu0 0.0
        %433 = vmatpush1.msra.mxu0 0.0
        %434 = vmatprep.subr.mxu0 0.0
        %435 = vmatpush1.msra.mxu0 0.0
        %436 = vmatprep.subr.mxu0 0.0
        %437 = vmatpush1.msra.mxu0 0.0
        %438 = vmatprep.subr.mxu0 0.0
        %439 = vmatpush1.msra.mxu0 0.0
        %440 = vmatprep.subr.mxu0 0.0
        %441 = vmatpush1.msra.mxu0 0.0
        %442 = vmatprep.subr.mxu0 0.0
        %443 = vmatpush1.msra.mxu0 0.0
        %444 = vmatprep.subr.mxu0 0.0
        %445 = vmatpush1.msra.mxu0 0.0
        %446 = vmatprep.subr.mxu0 0.0
        %447 = vmatpush1.msra.mxu0 0.0
        %448 = vmatprep.subr.mxu0 0.0
        %449 = vmatpush1.msra.mxu0 0.0
        %450 = vmatprep.subr.mxu0 0.0
        %451 = vmatpush1.msra.mxu0 0.0
        %452 = vmatprep.subr.mxu0 0.0
        %453 = vmatpush1.msra.mxu0 0.0
        %454 = vmatprep.subr.mxu0 0.0
        %455 = vmatpush1.msra.mxu0 0.0
        %456 = vmatprep.subr.mxu0 0.0
        %457 = vmatpush1.msra.mxu0 0.0
        %458 = vmatprep.subr.mxu0 0.0
        %459 = vmatpush1.msra.mxu0 0.0
        %460 = vmatprep.subr.mxu0 0.0
        %461 = vmatpush1.msra.mxu0 0.0
        %462 = vmatprep.subr.mxu0 0.0
        %463 = vmatpush1.msra.mxu0 0.0
        %464 = vmatprep.subr.mxu0 0.0
        %465 = vmatpush1.msra.mxu0 0.0
        %466 = vmatprep.subr.mxu0 0.0
        %467 = vmatpush1.msra.mxu0 0.0
        %468 = vmatprep.subr.mxu0 0.0
        %469 = vmatpush1.msra.mxu0 0.0
        %470 = vmatprep.subr.mxu0 0.0
        %471 = vmatpush1.msra.mxu0 0.0
        %472 = vmatprep.mubr.f32.mxu0 0.0
        %473 = vmatmul.mubr.f32.gmra.mrb[0].mxu0 %v402
        %v474 = vpop.f32.mrb[0].mxu0
        %v475 = vadd.f32 0.0, %v474
        %v476 = vpop.f32.mrb[0].mxu0
        %477 = vdwg.mxu0
        %vm478 = vcmask 130048
        %v480 = vsel %vm478, %v394, 0
        %482 = vmatprep.subr.mxu0 0.0
        %483 = vmatpush1.msra.mxu0 %v395
        %484 = vmatprep.subr.mxu0 0.0
        %485 = vmatpush1.msra.mxu0 %v396
        %486 = vmatprep.subr.mxu0 0.0
        %487 = vmatpush1.msra.mxu0 0.0
        %488 = vmatprep.subr.mxu0 0.0
        %489 = vmatpush1.msra.mxu0 0.0
        %490 = vmatprep.subr.mxu0 0.0
        %491 = vmatpush1.msra.mxu0 0.0
        %492 = vmatprep.subr.mxu0 0.0
        %493 = vmatpush1.msra.mxu0 0.0
        %494 = vmatprep.subr.mxu0 0.0
        %495 = vmatpush1.msra.mxu0 0.0
        %496 = vmatprep.subr.mxu0 0.0
        %497 = vmatpush1.msra.mxu0 0.0
        %498 = vmatprep.subr.mxu0 0.0
        %499 = vmatpush1.msra.mxu0 0.0
        %500 = vmatprep.subr.mxu0 0.0
        %501 = vmatpush1.msra.mxu0 0.0
        %502 = vmatprep.subr.mxu0 0.0
        %503 = vmatpush1.msra.mxu0 0.0
        %504 = vmatprep.subr.mxu0 0.0
        %505 = vmatpush1.msra.mxu0 0.0
        %506 = vmatprep.subr.mxu0 0.0
        %507 = vmatpush1.msra.mxu0 0.0
        %508 = vmatprep.subr.mxu0 0.0
        %509 = vmatpush1.msra.mxu0 0.0
        %510 = vmatprep.subr.mxu0 0.0
        %511 = vmatpush1.msra.mxu0 0.0
        %512 = vmatprep.subr.mxu0 0.0
        %513 = vmatpush1.msra.mxu0 0.0
        %514 = vmatprep.subr.mxu0 0.0
        %515 = vmatpush1.msra.mxu0 0.0
        %516 = vmatprep.subr.mxu0 0.0
        %517 = vmatpush1.msra.mxu0 0.0
        %518 = vmatprep.subr.mxu0 0.0
        %519 = vmatpush1.msra.mxu0 0.0
        %520 = vmatprep.subr.mxu0 0.0
        %521 = vmatpush1.msra.mxu0 0.0
        %522 = vmatprep.subr.mxu0 0.0
        %523 = vmatpush1.msra.mxu0 0.0
        %524 = vmatprep.subr.mxu0 0.0
        %525 = vmatpush1.msra.mxu0 0.0
        %526 = vmatprep.subr.mxu0 0.0
        %527 = vmatpush1.msra.mxu0 0.0
        %528 = vmatprep.subr.mxu0 0.0
        %529 = vmatpush1.msra.mxu0 0.0
        %530 = vmatprep.subr.mxu0 0.0
        %531 = vmatpush1.msra.mxu0 0.0
        %532 = vmatprep.subr.mxu0 0.0
        %533 = vmatpush1.msra.mxu0 0.0
        %534 = vmatprep.subr.mxu0 0.0
        %535 = vmatpush1.msra.mxu0 0.0
        %536 = vmatprep.subr.mxu0 0.0
        %537 = vmatpush1.msra.mxu0 0.0
        %538 = vmatprep.subr.mxu0 0.0
        %539 = vmatpush1.msra.mxu0 0.0
        %540 = vmatprep.subr.mxu0 0.0
        %541 = vmatpush1.msra.mxu0 0.0
        %542 = vmatprep.subr.mxu0 0.0
        %543 = vmatpush1.msra.mxu0 0.0
        %544 = vmatprep.subr.mxu0 0.0
        %545 = vmatpush1.msra.mxu0 0.0
        %546 = vmatprep.mubr.f32.mxu0 0.0
        %547 = vmatmul.mubr.f32.gmra.mrb[0].mxu0 %v480
        %v548 = vpop.f32.mrb[0].mxu0
        %v549 = vadd.f32 %v475, %v548
        %v550 = vpop.f32.mrb[0].mxu0
        %551 = vdwg.mxu0
        %v552 = vld [vmem:[%s345] sm:$0xff]
        %v553 = vld [vmem:[%s5] sm:$0xff]
        %v554 = vld [vmem:[%s5 + $0x8] sm:$0x3f]
        %vm555 = vcmask 113664
        %v557 = vsel %vm555, %v552, 0
        %vm559 = vcmask 1045504
        %v561 = vsel %vm559, %v554, 0
        %563 = vmatprep.subr.mxu0 0.0
        %564 = vmatpush1.msra.mxu0 %v553
        %565 = vmatprep.subr.mxu0 0.0
        %566 = vmatpush1.msra.mxu0 %v561
        %567 = vmatprep.subr.mxu0 0.0
        %568 = vmatpush1.msra.mxu0 0.0
        %569 = vmatprep.subr.mxu0 0.0
        %570 = vmatpush1.msra.mxu0 0.0
        %571 = vmatprep.subr.mxu0 0.0
        %572 = vmatpush1.msra.mxu0 0.0
        %573 = vmatprep.subr.mxu0 0.0
        %574 = vmatpush1.msra.mxu0 0.0
        %575 = vmatprep.subr.mxu0 0.0
        %576 = vmatpush1.msra.mxu0 0.0
        %577 = vmatprep.subr.mxu0 0.0
        %578 = vmatpush1.msra.mxu0 0.0
        %579 = vmatprep.subr.mxu0 0.0
        %580 = vmatpush1.msra.mxu0 0.0
        %581 = vmatprep.subr.mxu0 0.0
        %582 = vmatpush1.msra.mxu0 0.0
        %583 = vmatprep.subr.mxu0 0.0
        %584 = vmatpush1.msra.mxu0 0.0
        %585 = vmatprep.subr.mxu0 0.0
        %586 = vmatpush1.msra.mxu0 0.0
        %587 = vmatprep.subr.mxu0 0.0
        %588 = vmatpush1.msra.mxu0 0.0
        %589 = vmatprep.subr.mxu0 0.0
        %590 = vmatpush1.msra.mxu0 0.0
        %591 = vmatprep.subr.mxu0 0.0
        %592 = vmatpush1.msra.mxu0 0.0
        %593 = vmatprep.subr.mxu0 0.0
        %594 = vmatpush1.msra.mxu0 0.0
        %595 = vmatprep.subr.mxu0 0.0
        %596 = vmatpush1.msra.mxu0 0.0
        %597 = vmatprep.subr.mxu0 0.0
        %598 = vmatpush1.msra.mxu0 0.0
        %599 = vmatprep.subr.mxu0 0.0
        %600 = vmatpush1.msra.mxu0 0.0
        %601 = vmatprep.subr.mxu0 0.0
        %602 = vmatpush1.msra.mxu0 0.0
        %603 = vmatprep.subr.mxu0 0.0
        %604 = vmatpush1.msra.mxu0 0.0
        %605 = vmatprep.subr.mxu0 0.0
        %606 = vmatpush1.msra.mxu0 0.0
        %607 = vmatprep.subr.mxu0 0.0
        %608 = vmatpush1.msra.mxu0 0.0
        %609 = vmatprep.subr.mxu0 0.0
        %610 = vmatpush1.msra.mxu0 0.0
        %611 = vmatprep.subr.mxu0 0.0
        %612 = vmatpush1.msra.mxu0 0.0
        %613 = vmatprep.subr.mxu0 0.0
        %614 = vmatpush1.msra.mxu0 0.0
        %615 = vmatprep.subr.mxu0 0.0
        %616 = vmatpush1.msra.mxu0 0.0
        %617 = vmatprep.subr.mxu0 0.0
        %618 = vmatpush1.msra.mxu0 0.0
        %619 = vmatprep.subr.mxu0 0.0
        %620 = vmatpush1.msra.mxu0 0.0
        %621 = vmatprep.subr.mxu0 0.0
        %622 = vmatpush1.msra.mxu0 0.0
        %623 = vmatprep.subr.mxu0 0.0
        %624 = vmatpush1.msra.mxu0 0.0
        %625 = vmatprep.subr.mxu0 0.0
        %626 = vmatpush1.msra.mxu0 0.0
        %627 = vmatprep.mubr.f32.mxu0 0.0
        %628 = vmatmul.mubr.f32.gmra.mrb[0].mxu0 %v557
        %v629 = vpop.f32.mrb[0].mxu0
        %v630 = vadd.f32 0.0, %v629
        %v631 = vpop.f32.mrb[0].mxu0
        %632 = vdwg.mxu0
        %v633 = vadd.f32 %v549, %v630
        %v634 = vld [vmem:[%s6] sm:$0x1]
        %v636 = vlaneseq
        %v637 = vshrl.u32 %v636, 7
        %v638 = vsub.s32 0, %v637
        %v639 = vrot.slane %v634, %v638
        %v641 = vadd.f32 %v633, %v639
        %vm642 = vcmask 261120
        %643 = vst.msk [vmem:[%s393] sm:$0xff] %vm642, %v641
        %s644 = sand.u32 %s198, 1
        %s645 = scalar_lea.sflag [#allocation4], %s644
        %s646 = sand.u32 %s198, 1
        %s647 = smul.addr %s646, 8
        %s648 = scalar_lea.vmem [#allocation11], %s647
        // Predicated region
        $region69: #{tpu_custom_call.1} parent=47 // pred_check
          %p649 = pneg %p208
        $region70: #{tpu_custom_call.1} parent=47 // pred_check_branch
          %651 = sbr.rel (%p649) target = $region72
        $region71: #{tpu_custom_call.1} parent=47 // pred_region
          %s653 = ssub.s32 128, 128
          %654 = vsyncadd %s645, %s653
          %s655 = smul.addr %s28, 128
          %s656 = scalar_lea.hbm %s7, %s655
          %s658 = sshll.u32 %s648, 4
          %s659 = int_to_ptr.vmem [resolvable:$true] %s658
          %661 = dma.vmem_to_hbm [thread:$0]  %s659, 128, %s656, %s645
        $region72: #{tpu_custom_call.1} parent=47 // pred_fallthru
          _
      $region48: #{tpu_custom_call.1} parent=5 // pred_fallthru
        _
      %p662 = scmp.le.s32.totalorder 2, %s23
      // Predicated region
      $region73: #{tpu_custom_call.1} parent=5 // pred_check
        %p663 = pneg %p662
      $region74: #{tpu_custom_call.1} parent=5 // pred_check_branch
        %665 = sbr.rel (%p663) target = $region76
      $region75: #{tpu_custom_call.1} parent=5 // pred_region
        %s666 = ssub.s32 %s23, 2
        // Predicated region
        $region77: #{tpu_custom_call.1} parent=75 // pred_check
          %p667 = pneg %p214
        $region78: #{tpu_custom_call.1} parent=75 // pred_check_branch
          %669 = sbr.rel (%p667) target = $region80
        $region79: #{tpu_custom_call.1} parent=75 // pred_region
          %s670 = sand.u32 %s199, 1
          %s671 = scalar_lea.sflag [#allocation4], %s670
          %s672 = sand.u32 %s199, 1
          %s673 = smul.addr %s672, 8
          %s674 = scalar_lea.vmem [#allocation11], %s673
          %675 = dma.done %s671, 128
        $region80: #{tpu_custom_call.1} parent=75 // pred_fallthru
          _
      $region76: #{tpu_custom_call.1} parent=5 // pred_fallthru
        _
    $region6: #{tpu_custom_call.1} parent=1 // loop_footer
      %s27 = sadd.s32 1, %s23
    $region7: #{tpu_custom_call.1} parent=1 // loop_footer_branch
      %22 = sbr.rel target = $region3
    $region8: #{tpu_custom_call.1} parent=1 // loop_exit
      _
    %676 = vsyncpa [#allocation3], 1
    %s677 = scalar_lea.sflag [#allocation3], 1
    %678 = vsyncpa %s677, 1
    %679 = vsyncpa [#allocation6], 1
    %s680 = scalar_lea.sflag [#allocation6], 1
    %681 = vsyncpa %s680, 1
    %682 = vsyncpa [#allocation9], 1
    %683 = vsyncpa [#allocation4], 1
    %s684 = scalar_lea.sflag [#allocation4], 1
    %685 = vsyncpa %s684, 1

</llo_original>
